<compile_context>
chip_gen: v7x
topology: tpu7x:2x2x1
jax: 0.10.0
libtpu: 0.0.40
codegen_flags: <defaults>
</compile_context>

<pallas_src>
import numpy as np
import jax
import jax.numpy as jnp
from jax.experimental import pallas as pl
from jax.experimental.pallas import tpu as pltpu


# ------------------------------------------------------------------
# Pallas kernel (placeholder identity copy for future fusion work)
# ------------------------------------------------------------------
def _copy_kernel(x_ref, o_ref):
    # Straight VMEM load -> VMEM store of one lane-dense tile.
    o_ref[...] = x_ref[...]


def _lane_dense_2d_view(shape):
    """Pick a 2D (rows, cols) view whose last dim is a multiple of 128, if possible."""
    total = 1
    for d in shape:
        total *= d
    if len(shape) >= 2:
        hw = shape[-2] * shape[-1]
        if hw % 128 == 0:
            return total // hw, hw
    if shape[-1] % 128 == 0:
        return total // shape[-1], shape[-1]
    return None


def identity_forward_pallas(x: jax.Array) -> jax.Array:
    """Identity via a Pallas TPU copy kernel.

    Only kept as a shell for a future fused op — the real identity path in
    `Model.forward` returns `x` directly with no kernel at all.
    """
    orig_shape = x.shape
    layout = _lane_dense_2d_view(orig_shape)

    if layout is None:
        # Non-lane-aligned shape: single full-array block (block_shape == array dims
        # satisfies the (8,128) rule).  Output aliases input, so no extra HBM array.
        x2d = x if x.ndim == 2 else x.reshape(-1, orig_shape[-1])
        rows, cols = x2d.shape
        out2d = pl.pallas_call(
            _copy_kernel,
            out_shape=jax.ShapeDtypeStruct((rows, cols), x2d.dtype),
            grid=(1,),
            in_specs=[pl.BlockSpec((rows, cols), lambda i: (0, 0))],
            out_specs=pl.BlockSpec((rows, cols), lambda i: (0, 0)),
            input_output_aliases={0: 0},
            compiler_params=pltpu.CompilerParams(
                dimension_semantics=("arbitrary",),
            ),
        )(x2d)
        return out2d.reshape(orig_shape)

    rows, cols = layout
    x2d = x.reshape(rows, cols)
    itemsize = jnp.dtype(x2d.dtype).itemsize

    # Row tile: large (>=512 rows when available) to hit HBM roofline on v6e,
    # multiple of 8 for sublane alignment, capped so a double-buffered
    # (input + output) block stays well under v7x's 64 MiB VMEM.
    max_rows_by_vmem = max(8, (4 * 1024 * 1024) // max(1, cols * itemsize))
    block_rows = min(rows, 1024, max_rows_by_vmem)
    if block_rows < rows:
        block_rows = max(8, (block_rows // 8) * 8)
    grid = (pl.cdiv(rows, block_rows),)

    out2d = pl.pallas_call(
        _copy_kernel,
        out_shape=jax.ShapeDtypeStruct((rows, cols), x2d.dtype),
        grid=grid,
        in_specs=[pl.BlockSpec((block_rows, cols), lambda i: (i, 0))],
        out_specs=pl.BlockSpec((block_rows, cols), lambda i: (i, 0)),
        # Output buffer is the (copied/donated) input buffer: no second HBM array.
        input_output_aliases={0: 0},
        compiler_params=pltpu.CompilerParams(
            # "parallel" lets v7x shard the row-tile loop across its 2 TensorCores;
            # harmless on single-core v5e/v6e.
            dimension_semantics=("parallel",),
            vmem_limit_bytes=32 * 1024 * 1024,
        ),
    )(x2d)
    return out2d.reshape(orig_shape)


# ------------------------------------------------------------------
# JAX equivalent of the PyTorch `Model` wrapper
# ------------------------------------------------------------------
class Model:
    """Stores an (optional) inner model and evaluates it on inputs.

    forward(x) == model(x) if an inner model is provided, otherwise the identity.
    The identity case does NO data movement and launches NO kernel: returning the
    input array unchanged is free, whereas a copy kernel would force a full HBM
    read + write plus per-step launch overhead for zero work.
    """

    def __init__(self, model=None, save_path=None):
        self.model = model
        self.save_path = save_path
        # TODO(synk): save()/load() (torch.save / torch.load pickling) have no Pallas
        # equivalent and are intentionally omitted; only forward() is implemented.

    def forward(self, x):
        if self.model is not None:
            return self.model(x)
        return x  # zero-cost identity: no pallas_call, no HBM traffic

    __call__ = forward


if __name__ == "__main__":
    key = jax.random.PRNGKey(0)
    # Small NCHW input consistent with a feature-extraction forward pass.
    x = jax.random.normal(key, (2, 4, 16, 16), dtype=jnp.float32)
    x_host = np.asarray(jax.device_get(x))  # host reference copy

    # 1) Canonical case: Model(model=None) -> identity, no kernel at all.
    wrapper = Model(model=None)
    y_fast = jax.block_until_ready(wrapper(x))
    assert y_fast.shape == x.shape and y_fast.dtype == x.dtype
    assert np.allclose(np.asarray(jax.device_get(y_fast)), x_host)

    # 2) Kernel shell: Model wrapping the Pallas identity kernel as the inner model
    #    (exercises the tiled, input/output-aliased pallas_call once on TPU).
    wrapper_kernel = Model(model=identity_forward_pallas)
    y_kernel = jax.block_until_ready(wrapper_kernel(x))
    assert y_kernel.shape == x.shape and y_kernel.dtype == x.dtype
    assert np.allclose(np.asarray(jax.device_get(y_kernel)), x_host), "identity kernel mismatch"

    print("KERNEL_OK")
</pallas_src>

<mosaic_0001>
module attributes {stable_mosaic.version = 11 : i64} {
  func.func @_copy_kernel(%arg0: i32, %arg1: memref<8x256xf32, #tpu.memory_space<vmem>>, %arg2: memref<8x256xf32, #tpu.memory_space<vmem>>) attributes {dimension_semantics = [#tpu.dimension_semantics<parallel>], iteration_bounds = array<i64: 1>, scalar_prefetch = 0 : i64, scratch_operands = 0 : i64, tpu.core_type = #tpu.core_type<tc>, window_params = [{transform_indices = @transform_0, window_bounds = array<i64: 8, 256>}, {transform_indices = @transform_1, window_bounds = array<i64: 8, 256>}]} {
    %c0 = arith.constant 0 : index
    %c0_0 = arith.constant 0 : index
    %0 = vector.load %arg1[%c0, %c0_0] : memref<8x256xf32, #tpu.memory_space<vmem>>, vector<8x256xf32>
    %c0_1 = arith.constant 0 : index
    %c0_2 = arith.constant 0 : index
    %1 = vector.load %arg2[%c0_1, %c0_2] : memref<8x256xf32, #tpu.memory_space<vmem>>, vector<8x256xf32>
    tpu.vector_store %arg2[%c0_1, %c0_2], %0 {strides = array<i32>} : memref<8x256xf32, #tpu.memory_space<vmem>>, vector<8x256xf32>,
    return
  }
  func.func @transform_0(%arg0: i32) -> (i32, i32) {
    %c0_i32 = arith.constant 0 : i32
    %c0_i32_0 = arith.constant 0 : i32
    return %arg0, %c0_i32 : i32, i32
  }
  func.func @transform_1(%arg0: i32) -> (i32, i32) {
    %c0_i32 = arith.constant 0 : i32
    %c0_i32_0 = arith.constant 0 : i32
    return %arg0, %c0_i32 : i32, i32
  }
}

</mosaic_0001>

<llo_original>
// kernel: tpu_custom_call.1
$region0: #{tpu_custom_call.1}
  #allocation0 [shape = 'u32[]', space=smem, size = 0x4, offset = 0x4, fixed_abs, tag = 'smem constant byte address 0x4 - core index']
  #allocation1 [shape = 'u32[144,128]{1,0:T(1,128)}', space=vmem, size = 0x12000, scoped, tag = 'internal scratch']
  %s0 = inlined_call_operand.hbm [shape: f32[8,256], index: 0, kind: input, shape index: {}, may-alias: {0,1}]
  %s1 = inlined_call_operand.hbm [shape: f32[8,256], index: 1, kind: output, shape index: {}, may-alias: {0,1}]
  %s2 = sld [smem:[#allocation0]]
  $region18: #{tpu_custom_call.1} parent=0
    _
  %s4 = ssub.s32 1, %s2
  %s5 = scalar_select 0, %s4, %s2
  $region1: #{tpu_custom_call.1} parent=0
    #allocation2 [shape = 'u8[8192]{0}', space=vmem, size = 0x2000, scoped, tag = 'input window, operand 0, single buffered']
    #allocation3 [shape = 's32[1]{0}', space=sflag, size = 0x4, scoped, tag = 'scoped memory for tpu_custom_call.1']
    #allocation4 [shape = 's32[1]{0}', space=sflag, size = 0x4, scoped, tag = 'scoped memory for tpu_custom_call.1']
    #allocation5 [shape = 'u8[8192]{0}', space=vmem, size = 0x2000, scoped, tag = 'output window, operand 0, single buffered']
    %6 = vsyncpa [#allocation3], 0
    %7 = vsyncpa [#allocation4], 0
    // Predicated region
    $region2: #{tpu_custom_call.1} parent=1 // pred_check
      _
    $region3: #{tpu_custom_call.1} parent=1 // pred_check_branch
      %9 = sbr.rel (0) target = $region5
    $region4: #{tpu_custom_call.1} parent=1 // pred_region
      %s11 = ssub.s32 256, 256
      %12 = vsyncadd [#allocation3], %s11
      %s14 = sshll.u32 [#allocation2], 4
      %s15 = int_to_ptr.vmem [resolvable:$true] %s14
      %17 = dma.hbm_to_vmem [thread:$0]  %s0, 256, %s15, [#allocation3]
    $region5: #{tpu_custom_call.1} parent=1 // pred_fallthru
      _
    // Predicated region
    $region6: #{tpu_custom_call.1} parent=1 // pred_check
      _
    $region7: #{tpu_custom_call.1} parent=1 // pred_check_branch
      %19 = sbr.rel (0) target = $region9
    $region8: #{tpu_custom_call.1} parent=1 // pred_region
      %20 = dma.done [#allocation3], 256
    $region9: #{tpu_custom_call.1} parent=1 // pred_fallthru
      _
    %v21 = vld [vmem:[#allocation2] sm:$0xff]
    %v22 = vld [vmem:[#allocation2 + $0x8] sm:$0xff]
    %23 = vst [vmem:[#allocation5] sm:$0xff] %v21
    %24 = vst [vmem:[#allocation5 + $0x8] sm:$0xff] %v22
    // Predicated region
    $region10: #{tpu_custom_call.1} parent=1 // pred_check
      _
    $region11: #{tpu_custom_call.1} parent=1 // pred_check_branch
      %26 = sbr.rel (0) target = $region13
    $region12: #{tpu_custom_call.1} parent=1 // pred_region
      %s28 = ssub.s32 256, 256
      %29 = vsyncadd [#allocation4], %s28
      %s31 = sshll.u32 [#allocation5], 4
      %s32 = int_to_ptr.vmem [resolvable:$true] %s31
      %34 = dma.vmem_to_hbm [thread:$0]  %s32, 256, %s1, [#allocation4]
    $region13: #{tpu_custom_call.1} parent=1 // pred_fallthru
      _
    // Predicated region
    $region14: #{tpu_custom_call.1} parent=1 // pred_check
      _
    $region15: #{tpu_custom_call.1} parent=1 // pred_check_branch
      %36 = sbr.rel (0) target = $region17
    $region16: #{tpu_custom_call.1} parent=1 // pred_region
      %37 = dma.done [#allocation4], 256
    $region17: #{tpu_custom_call.1} parent=1 // pred_fallthru
      _
    %38 = vsyncpa [#allocation3], 1
    %39 = vsyncpa [#allocation4], 1

</llo_original>
